<compile_context>
chip_gen: v7x
topology: tpu7x:2x2x1
jax: 0.10.0
libtpu: 0.0.40
codegen_flags: <defaults>
</compile_context>

<pallas_src>
import jax
import jax.numpy as jnp
from jax import lax
from jax.experimental import pallas as pl
from jax.experimental.pallas import tpu as pltpu


def _fused_conv_kernel(x_ref, w1_ref, b1_ref, w2_ref, b2p_ref, o_ref):
    # x_ref:   (NB, 3, H, W)   VMEM  -- raw (unpadded) input block
    # w1_ref:  (3,) SMEM, b1_ref:  (1,) SMEM     (conv1 weight / bias)
    # w2_ref:  (5,) SMEM, b2p_ref: (5,) SMEM     (conv2 weight, bias + 2)
    # o_ref:   (NB, 5, Hp, Wp) VMEM  -- Hp = H + 4, Wp = W + 4
    NB = x_ref.shape[0]
    H, W = x_ref.shape[2], x_ref.shape[3]
    Hp, Wp = o_ref.shape[2], o_ref.shape[3]

    # Native-tile-aligned register shape for the rolls (same vreg count, free).
    Hl = ((Hp + 7) // 8) * 8
    Wl = ((Wp + 127) // 128) * 128

    # conv2's zero-padding ring = outermost ring of the (Hp, Wp) plane.
    ri = lax.broadcasted_iota(jnp.int32, (Hl, Wl), 0)
    ci = lax.broadcasted_iota(jnp.int32, (Hl, Wl), 1)
    not_outer = ((ri >= 1) & (ri <= Hp - 2) & (ci >= 1) & (ci <= Wp - 2))

    # Constant high-side extensions (hoisted out of the batch loop).
    b1 = b1_ref[0]
    fill_rows = jnp.full((Hl - H, W), b1, jnp.float32)
    fill_cols = jnp.full((Hl, Wl - W), b1, jnp.float32)

    for b in range(NB):
        # conv1 (1x1, 3->1) + bias on the real pixels (VPU).
        v1 = (w1_ref[0] * x_ref[b, 0]
              + w1_ref[1] * x_ref[b, 1]
              + w1_ref[2] * x_ref[b, 2]
              + b1)                                          # (H, W)

        # Assemble conv1's padded output plane in registers:
        #   pad on the HIGH side with b1 (conv1's pad-ring value, offset-0
        #   placement of v1, splat fill), then roll by 2 along both axes so
        #   the real pixels land at (2, 2) and the constant wraps around into
        #   the 2-wide frame.  No VMEM scratch, no unaligned stores.
        big = jnp.concatenate([v1, fill_rows], axis=0)       # (Hl, W)
        big = jnp.concatenate([big, fill_cols], axis=1)      # (Hl, Wl)
        big = pltpu.roll(big, 2, 0)                          # XLU sublane roll
        big = pltpu.roll(big, 2, 1)                          # XLU lane roll

        # v2 = sigmoid(conv1 out); conv2's zero padding on the outermost ring.
        v2p = jnp.where(not_outer, jax.nn.sigmoid(big), 0.0)[:Hp, :Wp]

        # conv2 (1x1, 1->5) + (bias + 2), sigmoid.
        # One dense (Hp, Wp) store per output channel -- no concat temporaries.
        for co in range(5):
            o_ref[b, co] = jax.nn.sigmoid(w2_ref[co] * v2p + b2p_ref[co])


def model_forward(x, w1, b1, w2, b2, *, block_n=None):
    """x: (N, 3, H, W) float32 NCHW.  Returns (N, 5, H+4, W+4) float32 NCHW."""
    N, C, H, W = x.shape
    assert C == 3
    Hp, Wp = H + 4, W + 4

    x = x.astype(jnp.float32)
    b2p = (b2 + 2.0).astype(jnp.float32)      # fold the "+ 2" into conv2's bias

    # Block several batch elements per grid step to amortize per-step pipeline
    # overhead, but keep >= 2 grid steps so v7x's two TensorCores both get work
    # from the "parallel" batch axis.
    if block_n is None:
        block_n = 1
        for nb in (8, 4, 2):
            if N % nb == 0 and N // nb >= 2:
                block_n = nb
                break
    assert N % block_n == 0
    grid = (N // block_n,)

    # Advisory cost estimate so XLA can overlap this small call with neighbors.
    flops = N * (6 * H * W + 10 * Hp * Wp)
    transcendentals = N * 6 * Hp * Wp
    bytes_accessed = 4 * N * (3 * H * W + 5 * Hp * Wp)

    # TODO(synk): for very large images (H=W >~ 700-1000), add a row-block grid
    # axis (padding rows are analytic constants, so no real halo DMA is needed)
    # so per-step residency stays inside v7x's 64 MiB VMEM and the register-
    # resident v2p stays within the 64-vreg file.
    return pl.pallas_call(
        _fused_conv_kernel,
        out_shape=jax.ShapeDtypeStruct((N, 5, Hp, Wp), jnp.float32),
        grid=grid,
        in_specs=[
            pl.BlockSpec((block_n, 3, H, W), lambda n: (n, 0, 0, 0)),
            pl.BlockSpec(memory_space=pltpu.MemorySpace.SMEM),
            pl.BlockSpec(memory_space=pltpu.MemorySpace.SMEM),
            pl.BlockSpec(memory_space=pltpu.MemorySpace.SMEM),
            pl.BlockSpec(memory_space=pltpu.MemorySpace.SMEM),
        ],
        out_specs=pl.BlockSpec((block_n, 5, Hp, Wp), lambda n: (n, 0, 0, 0)),
        compiler_params=pltpu.CompilerParams(
            dimension_semantics=("parallel",)),
        cost_estimate=pl.CostEstimate(
            flops=flops,
            transcendentals=transcendentals,
            bytes_accessed=bytes_accessed),
    )(x, w1.astype(jnp.float32), b1.astype(jnp.float32),
      w2.astype(jnp.float32), b2p)


def _reference_forward(x, w1, b1, w2, b2):
    """Pure-JAX reference matching the PyTorch module semantics."""
    v1 = lax.conv_general_dilated(
        x, w1.reshape(1, 3, 1, 1), (1, 1), ((1, 1), (1, 1)),
        dimension_numbers=("NCHW", "OIHW", "NCHW")) + b1.reshape(1, 1, 1, 1)
    v2 = jax.nn.sigmoid(v1)
    v3 = lax.conv_general_dilated(
        v2, w2.reshape(5, 1, 1, 1), (1, 1), ((1, 1), (1, 1)),
        dimension_numbers=("NCHW", "OIHW", "NCHW")) + b2.reshape(1, 5, 1, 1)
    return jax.nn.sigmoid(v3 + 2.0)


if __name__ == "__main__":
    key = jax.random.PRNGKey(0)
    kx, kw1, kb1, kw2, kb2 = jax.random.split(key, 5)

    # Small shapes consistent with the module (original was (2, 3, 100, 100)).
    N, C, H, W = 2, 3, 16, 16
    x = jax.random.normal(kx, (N, C, H, W), jnp.float32)

    # Deterministic parameter init (PyTorch Conv2d-style uniform(-k, k), k=1/sqrt(fan_in)).
    k1 = 1.0 / jnp.sqrt(3.0)   # conv1 fan_in = 3*1*1
    k2 = 1.0                   # conv2 fan_in = 1*1*1
    w1 = jax.random.uniform(kw1, (3,), jnp.float32, -k1, k1)   # conv1.weight (1,3,1,1) squeezed
    b1 = jax.random.uniform(kb1, (1,), jnp.float32, -k1, k1)   # conv1.bias
    w2 = jax.random.uniform(kw2, (5,), jnp.float32, -k2, k2)   # conv2.weight (5,1,1,1) squeezed
    b2 = jax.random.uniform(kb2, (5,), jnp.float32, -k2, k2)   # conv2.bias

    out = model_forward(x, w1, b1, w2, b2)
    jax.block_until_ready(out)

    ref = _reference_forward(x, w1, b1, w2, b2)
    assert out.shape == (N, 5, H + 4, W + 4)
    assert jnp.allclose(out, ref, atol=1e-5, rtol=1e-5)

    print("KERNEL_OK")
</pallas_src>

<mosaic_0001>
module attributes {stable_mosaic.version = 11 : i64} {
  func.func @_fused_conv_kernel(%arg0: i32, %arg1: memref<1x3x16x16xf32, #tpu.memory_space<vmem>>, %arg2: memref<3xf32, #tpu.memory_space<smem>>, %arg3: memref<1xf32, #tpu.memory_space<smem>>, %arg4: memref<5xf32, #tpu.memory_space<smem>>, %arg5: memref<5xf32, #tpu.memory_space<smem>>, %arg6: memref<1x5x20x20xf32, #tpu.memory_space<vmem>>) attributes {dimension_semantics = [#tpu.dimension_semantics<parallel>], iteration_bounds = array<i64: 2>, scalar_prefetch = 0 : i64, scratch_operands = 0 : i64, tpu.core_type = #tpu.core_type<tc>, window_params = [{transform_indices = @transform_0, window_bounds = array<i64: 1, 3, 16, 16>}, {transform_indices = @transform_1, window_bounds = array<i64: 3>}, {transform_indices = @transform_2, window_bounds = array<i64: 1>}, {transform_indices = @transform_3, window_bounds = array<i64: 5>}, {transform_indices = @transform_4, window_bounds = array<i64: 5>}, {transform_indices = @transform_5, window_bounds = array<i64: 1, 5, 20, 20>}]} {
    %0 = tpu.iota {dimensions = array<i32: 0>} : vector<24x128xi32>
    %1 = tpu.iota {dimensions = array<i32: 1>} : vector<24x128xi32>
    %c1_i32 = arith.constant 1 : i32
    %2 = vector.broadcast %c1_i32 : i32 to vector<24x128xi32>
    %3 = arith.cmpi sge, %0, %2 : vector<24x128xi32>
    %c18_i32 = arith.constant 18 : i32
    %4 = vector.broadcast %c18_i32 : i32 to vector<24x128xi32>
    %5 = arith.cmpi sle, %0, %4 : vector<24x128xi32>
    %6 = arith.andi %3, %5 : vector<24x128xi1>
    %c1_i32_0 = arith.constant 1 : i32
    %7 = vector.broadcast %c1_i32_0 : i32 to vector<24x128xi32>
    %8 = arith.cmpi sge, %1, %7 : vector<24x128xi32>
    %9 = arith.andi %6, %8 : vector<24x128xi1>
    %c18_i32_1 = arith.constant 18 : i32
    %10 = vector.broadcast %c18_i32_1 : i32 to vector<24x128xi32>
    %11 = arith.cmpi sle, %1, %10 : vector<24x128xi32>
    %12 = arith.andi %9, %11 : vector<24x128xi1>
    %c0 = arith.constant 0 : index
    %13 = memref.load %arg3[%c0] : memref<1xf32, #tpu.memory_space<smem>>
    %14 = vector.broadcast %13 : f32 to vector<8x16xf32>
    %15 = vector.broadcast %13 : f32 to vector<24x112xf32>
    %c0_2 = arith.constant 0 : index
    %16 = memref.load %arg2[%c0_2] : memref<3xf32, #tpu.memory_space<smem>>
    %c0_3 = arith.constant 0 : index
    %c0_4 = arith.constant 0 : index
    %c0_5 = arith.constant 0 : index
    %c0_6 = arith.constant 0 : index
    %17 = vector.load %arg1[%c0_3, %c0_4, %c0_5, %c0_6] : memref<1x3x16x16xf32, #tpu.memory_space<vmem>>, vector<1x1x16x16xf32>
    %18 = vector.shape_cast %17 : vector<1x1x16x16xf32> to vector<16x16xf32>
    %19 = vector.broadcast %16 : f32 to vector<16x16xf32>
    %20 = arith.mulf %19, %18 : vector<16x16xf32>
    %c1 = arith.constant 1 : index
    %21 = memref.load %arg2[%c1] : memref<3xf32, #tpu.memory_space<smem>>
    %c0_7 = arith.constant 0 : index
    %c1_8 = arith.constant 1 : index
    %c0_9 = arith.constant 0 : index
    %c0_10 = arith.constant 0 : index
    %22 = vector.load %arg1[%c0_7, %c1_8, %c0_9, %c0_10] : memref<1x3x16x16xf32, #tpu.memory_space<vmem>>, vector<1x1x16x16xf32>
    %23 = vector.shape_cast %22 : vector<1x1x16x16xf32> to vector<16x16xf32>
    %24 = vector.broadcast %21 : f32 to vector<16x16xf32>
    %25 = arith.mulf %24, %23 : vector<16x16xf32>
    %26 = arith.addf %20, %25 : vector<16x16xf32>
    %c2 = arith.constant 2 : index
    %27 = memref.load %arg2[%c2] : memref<3xf32, #tpu.memory_space<smem>>
    %c0_11 = arith.constant 0 : index
    %c2_12 = arith.constant 2 : index
    %c0_13 = arith.constant 0 : index
    %c0_14 = arith.constant 0 : index
    %28 = vector.load %arg1[%c0_11, %c2_12, %c0_13, %c0_14] : memref<1x3x16x16xf32, #tpu.memory_space<vmem>>, vector<1x1x16x16xf32>
    %29 = vector.shape_cast %28 : vector<1x1x16x16xf32> to vector<16x16xf32>
    %30 = vector.broadcast %27 : f32 to vector<16x16xf32>
    %31 = arith.mulf %30, %29 : vector<16x16xf32>
    %32 = arith.addf %26, %31 : vector<16x16xf32>
    %33 = vector.broadcast %13 : f32 to vector<16x16xf32>
    %34 = arith.addf %32, %33 : vector<16x16xf32>
    %35 = tpu.concatenate %34, %14 in 0 : vector<16x16xf32>, vector<8x16xf32> -> vector<24x16xf32>
    %36 = tpu.concatenate %35, %15 in 1 : vector<24x16xf32>, vector<24x112xf32> -> vector<24x128xf32>
    %c2_i32 = arith.constant 2 : i32
    %37 = tpu.dynamic_rotate %36 by %c2_i32 dim 0 : vector<24x128xf32>, i32 -> vector<24x128xf32>
    %c2_i32_15 = arith.constant 2 : i32
    %38 = tpu.dynamic_rotate %37 by %c2_i32_15 dim 1 : vector<24x128xf32>, i32 -> vector<24x128xf32>
    %39 = arith.negf %38 : vector<24x128xf32>
    %40 = math.exp %39 : vector<24x128xf32>
    %cst = arith.constant 1.000000e+00 : f32
    %41 = vector.broadcast %cst : f32 to vector<24x128xf32>
    %42 = arith.addf %41, %40 : vector<24x128xf32>
    %43 = arith.divf %41, %42 : vector<24x128xf32>
    %cst_16 = arith.constant 0.000000e+00 : f32
    %44 = vector.broadcast %cst_16 : f32 to vector<24x128xf32>
    %45 = arith.select %12, %43, %44 : vector<24x128xi1>, vector<24x128xf32>
    %46 = vector.extract_strided_slice %45 {offsets = [0, 0], sizes = [20, 20], strides = [1, 1]} : vector<24x128xf32> to vector<20x20xf32>
    %c0_17 = arith.constant 0 : index
    %47 = memref.load %arg4[%c0_17] : memref<5xf32, #tpu.memory_space<smem>>
    %48 = vector.broadcast %47 : f32 to vector<20x20xf32>
    %49 = arith.mulf %48, %46 : vector<20x20xf32>
    %c0_18 = arith.constant 0 : index
    %50 = memref.load %arg5[%c0_18] : memref<5xf32, #tpu.memory_space<smem>>
    %51 = vector.broadcast %50 : f32 to vector<20x20xf32>
    %52 = arith.addf %49, %51 : vector<20x20xf32>
    %53 = arith.negf %52 : vector<20x20xf32>
    %54 = math.exp %53 : vector<20x20xf32>
    %cst_19 = arith.constant 1.000000e+00 : f32
    %55 = vector.broadcast %cst_19 : f32 to vector<20x20xf32>
    %56 = arith.addf %55, %54 : vector<20x20xf32>
    %57 = arith.divf %55, %56 : vector<20x20xf32>
    %c0_20 = arith.constant 0 : index
    %c0_21 = arith.constant 0 : index
    %c0_22 = arith.constant 0 : index
    %c0_23 = arith.constant 0 : index
    %58 = vector.load %arg6[%c0_20, %c0_21, %c0_22, %c0_23] : memref<1x5x20x20xf32, #tpu.memory_space<vmem>>, vector<1x1x20x20xf32>
    %59 = vector.shape_cast %58 : vector<1x1x20x20xf32> to vector<20x20xf32>
    %60 = vector.shape_cast %57 : vector<20x20xf32> to vector<1x1x20x20xf32>
    tpu.vector_store %arg6[%c0_20, %c0_21, %c0_22, %c0_23], %60 {strides = array<i32>} : memref<1x5x20x20xf32, #tpu.memory_space<vmem>>, vector<1x1x20x20xf32>,
    %c1_24 = arith.constant 1 : index
    %61 = memref.load %arg4[%c1_24] : memref<5xf32, #tpu.memory_space<smem>>
    %62 = vector.broadcast %61 : f32 to vector<20x20xf32>
    %63 = arith.mulf %62, %46 : vector<20x20xf32>
    %c1_25 = arith.constant 1 : index
    %64 = memref.load %arg5[%c1_25] : memref<5xf32, #tpu.memory_space<smem>>
    %65 = vector.broadcast %64 : f32 to vector<20x20xf32>
    %66 = arith.addf %63, %65 : vector<20x20xf32>
    %67 = arith.negf %66 : vector<20x20xf32>
    %68 = math.exp %67 : vector<20x20xf32>
    %cst_26 = arith.constant 1.000000e+00 : f32
    %69 = vector.broadcast %cst_26 : f32 to vector<20x20xf32>
    %70 = arith.addf %69, %68 : vector<20x20xf32>
    %71 = arith.divf %69, %70 : vector<20x20xf32>
    %c0_27 = arith.constant 0 : index
    %c1_28 = arith.constant 1 : index
    %c0_29 = arith.constant 0 : index
    %c0_30 = arith.constant 0 : index
    %72 = vector.load %arg6[%c0_27, %c1_28, %c0_29, %c0_30] : memref<1x5x20x20xf32, #tpu.memory_space<vmem>>, vector<1x1x20x20xf32>
    %73 = vector.shape_cast %72 : vector<1x1x20x20xf32> to vector<20x20xf32>
    %74 = vector.shape_cast %71 : vector<20x20xf32> to vector<1x1x20x20xf32>
    tpu.vector_store %arg6[%c0_27, %c1_28, %c0_29, %c0_30], %74 {strides = array<i32>} : memref<1x5x20x20xf32, #tpu.memory_space<vmem>>, vector<1x1x20x20xf32>,
    %c2_31 = arith.constant 2 : index
    %75 = memref.load %arg4[%c2_31] : memref<5xf32, #tpu.memory_space<smem>>
    %76 = vector.broadcast %75 : f32 to vector<20x20xf32>
    %77 = arith.mulf %76, %46 : vector<20x20xf32>
    %c2_32 = arith.constant 2 : index
    %78 = memref.load %arg5[%c2_32] : memref<5xf32, #tpu.memory_space<smem>>
    %79 = vector.broadcast %78 : f32 to vector<20x20xf32>
    %80 = arith.addf %77, %79 : vector<20x20xf32>
    %81 = arith.negf %80 : vector<20x20xf32>
    %82 = math.exp %81 : vector<20x20xf32>
    %cst_33 = arith.constant 1.000000e+00 : f32
    %83 = vector.broadcast %cst_33 : f32 to vector<20x20xf32>
    %84 = arith.addf %83, %82 : vector<20x20xf32>
    %85 = arith.divf %83, %84 : vector<20x20xf32>
    %c0_34 = arith.constant 0 : index
    %c2_35 = arith.constant 2 : index
    %c0_36 = arith.constant 0 : index
    %c0_37 = arith.constant 0 : index
    %86 = vector.load %arg6[%c0_34, %c2_35, %c0_36, %c0_37] : memref<1x5x20x20xf32, #tpu.memory_space<vmem>>, vector<1x1x20x20xf32>
    %87 = vector.shape_cast %86 : vector<1x1x20x20xf32> to vector<20x20xf32>
    %88 = vector.shape_cast %85 : vector<20x20xf32> to vector<1x1x20x20xf32>
    tpu.vector_store %arg6[%c0_34, %c2_35, %c0_36, %c0_37], %88 {strides = array<i32>} : memref<1x5x20x20xf32, #tpu.memory_space<vmem>>, vector<1x1x20x20xf32>,
    %c3 = arith.constant 3 : index
    %89 = memref.load %arg4[%c3] : memref<5xf32, #tpu.memory_space<smem>>
    %90 = vector.broadcast %89 : f32 to vector<20x20xf32>
    %91 = arith.mulf %90, %46 : vector<20x20xf32>
    %c3_38 = arith.constant 3 : index
    %92 = memref.load %arg5[%c3_38] : memref<5xf32, #tpu.memory_space<smem>>
    %93 = vector.broadcast %92 : f32 to vector<20x20xf32>
    %94 = arith.addf %91, %93 : vector<20x20xf32>
    %95 = arith.negf %94 : vector<20x20xf32>
    %96 = math.exp %95 : vector<20x20xf32>
    %cst_39 = arith.constant 1.000000e+00 : f32
    %97 = vector.broadcast %cst_39 : f32 to vector<20x20xf32>
    %98 = arith.addf %97, %96 : vector<20x20xf32>
    %99 = arith.divf %97, %98 : vector<20x20xf32>
    %c0_40 = arith.constant 0 : index
    %c3_41 = arith.constant 3 : index
    %c0_42 = arith.constant 0 : index
    %c0_43 = arith.constant 0 : index
    %100 = vector.load %arg6[%c0_40, %c3_41, %c0_42, %c0_43] : memref<1x5x20x20xf32, #tpu.memory_space<vmem>>, vector<1x1x20x20xf32>
    %101 = vector.shape_cast %100 : vector<1x1x20x20xf32> to vector<20x20xf32>
    %102 = vector.shape_cast %99 : vector<20x20xf32> to vector<1x1x20x20xf32>
    tpu.vector_store %arg6[%c0_40, %c3_41, %c0_42, %c0_43], %102 {strides = array<i32>} : memref<1x5x20x20xf32, #tpu.memory_space<vmem>>, vector<1x1x20x20xf32>,
    %c4 = arith.constant 4 : index
    %103 = memref.load %arg4[%c4] : memref<5xf32, #tpu.memory_space<smem>>
    %104 = vector.broadcast %103 : f32 to vector<20x20xf32>
    %105 = arith.mulf %104, %46 : vector<20x20xf32>
    %c4_44 = arith.constant 4 : index
    %106 = memref.load %arg5[%c4_44] : memref<5xf32, #tpu.memory_space<smem>>
    %107 = vector.broadcast %106 : f32 to vector<20x20xf32>
    %108 = arith.addf %105, %107 : vector<20x20xf32>
    %109 = arith.negf %108 : vector<20x20xf32>
    %110 = math.exp %109 : vector<20x20xf32>
    %cst_45 = arith.constant 1.000000e+00 : f32
    %111 = vector.broadcast %cst_45 : f32 to vector<20x20xf32>
    %112 = arith.addf %111, %110 : vector<20x20xf32>
    %113 = arith.divf %111, %112 : vector<20x20xf32>
    %c0_46 = arith.constant 0 : index
    %c4_47 = arith.constant 4 : index
    %c0_48 = arith.constant 0 : index
    %c0_49 = arith.constant 0 : index
    %114 = vector.load %arg6[%c0_46, %c4_47, %c0_48, %c0_49] : memref<1x5x20x20xf32, #tpu.memory_space<vmem>>, vector<1x1x20x20xf32>
    %115 = vector.shape_cast %114 : vector<1x1x20x20xf32> to vector<20x20xf32>
    %116 = vector.shape_cast %113 : vector<20x20xf32> to vector<1x1x20x20xf32>
    tpu.vector_store %arg6[%c0_46, %c4_47, %c0_48, %c0_49], %116 {strides = array<i32>} : memref<1x5x20x20xf32, #tpu.memory_space<vmem>>, vector<1x1x20x20xf32>,
    return
  }
  func.func @transform_0(%arg0: i32) -> (i32, i32, i32, i32) {
    %c0_i32 = arith.constant 0 : i32
    %c0_i32_0 = arith.constant 0 : i32
    %c0_i32_1 = arith.constant 0 : i32
    %c0_i32_2 = arith.constant 0 : i32
    return %arg0, %c0_i32, %c0_i32_0, %c0_i32_1 : i32, i32, i32, i32
  }
  func.func @transform_1(%arg0: i32) -> i32 {
    %c0_i32 = arith.constant 0 : i32
    %c0_i32_0 = arith.constant 0 : i32
    return %c0_i32 : i32
  }
  func.func @transform_2(%arg0: i32) -> i32 {
    %c0_i32 = arith.constant 0 : i32
    %c0_i32_0 = arith.constant 0 : i32
    return %c0_i32 : i32
  }
  func.func @transform_3(%arg0: i32) -> i32 {
    %c0_i32 = arith.constant 0 : i32
    %c0_i32_0 = arith.constant 0 : i32
    return %c0_i32 : i32
  }
  func.func @transform_4(%arg0: i32) -> i32 {
    %c0_i32 = arith.constant 0 : i32
    %c0_i32_0 = arith.constant 0 : i32
    return %c0_i32 : i32
  }
  func.func @transform_5(%arg0: i32) -> (i32, i32, i32, i32) {
    %c0_i32 = arith.constant 0 : i32
    %c0_i32_0 = arith.constant 0 : i32
    %c0_i32_1 = arith.constant 0 : i32
    %c0_i32_2 = arith.constant 0 : i32
    return %arg0, %c0_i32, %c0_i32_0, %c0_i32_1 : i32, i32, i32, i32
  }
}

</mosaic_0001>

<llo_original>
// kernel: tpu_custom_call.1
$region0: #{tpu_custom_call.1}
  #allocation0 [shape = 'u32[]', space=smem, size = 0x4, offset = 0x4, fixed_abs, tag = 'smem constant byte address 0x4 - core index']
  #allocation1 [shape = 'u32[144,128]{1,0:T(1,128)}', space=vmem, size = 0x12000, scoped, tag = 'internal scratch']
  #allocation2 [shape = 'f32[1]{0:T(128)S(6)}', space=smem, size = 0x200, scoped, tag = 'scoped memory for tpu_custom_call.1']
  %s0 = inlined_call_operand.hbm [shape: f32[2,3,16,16], index: 0, kind: input, shape index: {}]
  %s1 = inlined_call_operand.vmem [shape: f32[3], index: 1, kind: input, shape index: {}]
  %s2 = inlined_call_operand.<no memory space> [shape: f32[1], index: 2, kind: input, shape index: {}]
  %s3 = inlined_call_operand.vmem [shape: f32[5], index: 3, kind: input, shape index: {}]
  %s4 = inlined_call_operand.vmem [shape: f32[5], index: 4, kind: input, shape index: {}]
  %s5 = inlined_call_operand.vmem [shape: f32[2,5,20,20], index: 5, kind: output, shape index: {}]
  %s6 = sld [smem:[#allocation0]]
  $region69: #{tpu_custom_call.1} parent=0
    _
  %s8 = ssub.s32 1, %s6
  %s9 = scalar_select 0, %s8, %s6
  %10 = sst [smem:[#allocation2]] %s2
  $region1: #{tpu_custom_call.1} parent=0
    #allocation3 [shape = 'u8[49152]{0}', space=vmem, size = 0xc000, scoped, tag = 'input window, operand 0']
    #allocation4 [shape = 's32[2]{0}', space=sflag, size = 0x8, scoped, tag = 'scoped memory for tpu_custom_call.1']
    #allocation5 [shape = 's32[2]{0}', space=sflag, size = 0x8, scoped, tag = 'scoped memory for tpu_custom_call.1']
    #allocation6 [shape = 'u8[512]{0}', space=smem, size = 0x200, scoped, tag = 'input window, operand 1, single buffered']
    #allocation7 [shape = 'u8[512]{0}', space=smem, size = 0x200, scoped, tag = 'input window, operand 3, single buffered']
    #allocation8 [shape = 's32[1]{0}', space=sflag, size = 0x4, scoped, tag = 'scoped memory for tpu_custom_call.1']
    #allocation9 [shape = 'u8[512]{0}', space=smem, size = 0x200, scoped, tag = 'input window, operand 4, single buffered']
    %11 = vsyncpa [#allocation4], 0
    %s12 = scalar_lea.sflag [#allocation4], 1
    %13 = vsyncpa %s12, 0
    %14 = vsyncpa [#allocation5], 0
    %15 = vsyncpa [#allocation8], 0
    loop: start=0, step=1, limit=4
    $region2: #{tpu_custom_call.1} parent=1 // loop_pre_header
      _
    $region3: #{tpu_custom_call.1} parent=1 // loop_header
      %s17 = sphi 0, %s21
      %p18 = scmp.ge.s32.totalorder %s17, 4
      %s27 = sphi 0, %s29
      %s30 = sphi 0, %s27
      %s31 = sphi 0, %s30
      %s47 = sphi 0, %s31
      %s51 = sphi 0, %s51
      %s53 = sphi 0, %s51
      %s54 = sphi 0, %s53
      %s68 = sphi 0, %s54
      %s72 = sphi 0, %s72
      %s74 = sphi 0, %s72
      %s75 = sphi 0, %s74
      %s89 = sphi 0, %s75
      %s93 = sphi 0, %s93
      %s95 = sphi 0, %s93
      %s96 = sphi 0, %s95
      %s110 = sphi 0, %s96
      %s114 = sphi 0, %s114
      %s116 = sphi 0, %s114
      %s117 = sphi 0, %s116
      %s131 = sphi 0, %s117
      %s137 = sphi 0, %s139
      %s140 = sphi 0, %s137
      %s141 = sphi 0, %s140
      %s157 = sphi 0, %s141
    $region4: #{tpu_custom_call.1} parent=1 // loop_header_branch
      %20 = sbr.rel (%p18) target = $region8
    $region5: #{tpu_custom_call.1} parent=1 // loop_body
      %s22 = ssub.s32 %s17, 1
      %s23 = ssub.s32 %s17, 2
      %s24 = sadd.s32 %s17, 1
      %s25 = ssub.s32 %s17, %s24
      %p26 = scmp.eq.s32.totalorder %s25, 0
      %s28 = sadd.s32 %s27, 1
      %s29 = scalar_select %p26, %s27, %s28
      %p32 = pneg %p26
      %p33 = scmp.eq.s32.totalorder %s17, 1
      %p34 = por %p32, %p33
      %p35 = scmp.ne.s32.totalorder %s27, %s30
      %p36 = scmp.eq.s32.totalorder %s17, 0
      %p37 = por %p35, %p36
      %p38 = scmp.ne.s32.totalorder %s27, %s30
      %p39 = scmp.eq.s32.totalorder %s22, 1
      %p40 = por %p38, %p39
      %p41 = scmp.ne.s32.totalorder %s30, %s31
      %p42 = scmp.eq.s32.totalorder %s22, 0
      %p43 = por %p41, %p42
      %p44 = scmp.ne.s32.totalorder %s30, %s31
      %p45 = scmp.eq.s32.totalorder %s23, 1
      %p46 = por %p44, %p45
      %p48 = scmp.ne.s32.totalorder %s31, %s47
      %p49 = scmp.eq.s32.totalorder %s23, 0
      %p50 = por %p48, %p49
      %s52 = sadd.s32 %s51, 1
      %p55 = scmp.eq.s32.totalorder %s17, 1
      %p56 = scmp.ne.s32.totalorder %s51, %s53
      %p57 = scmp.eq.s32.totalorder %s17, 0
      %p58 = por %p56, %p57
      %p59 = scmp.ne.s32.totalorder %s51, %s53
      %p60 = scmp.eq.s32.totalorder %s22, 1
      %p61 = por %p59, %p60
      %p62 = scmp.ne.s32.totalorder %s53, %s54
      %p63 = scmp.eq.s32.totalorder %s22, 0
      %p64 = por %p62, %p63
      %p65 = scmp.ne.s32.totalorder %s53, %s54
      %p66 = scmp.eq.s32.totalorder %s23, 1
      %p67 = por %p65, %p66
      %p69 = scmp.ne.s32.totalorder %s54, %s68
      %p70 = scmp.eq.s32.totalorder %s23, 0
      %p71 = por %p69, %p70
      %s73 = sadd.s32 %s72, 1
      %p76 = scmp.eq.s32.totalorder %s17, 1
      %p77 = scmp.ne.s32.totalorder %s72, %s74
      %p78 = scmp.eq.s32.totalorder %s17, 0
      %p79 = por %p77, %p78
      %p80 = scmp.ne.s32.totalorder %s72, %s74
      %p81 = scmp.eq.s32.totalorder %s22, 1
      %p82 = por %p80, %p81
      %p83 = scmp.ne.s32.totalorder %s74, %s75
      %p84 = scmp.eq.s32.totalorder %s22, 0
      %p85 = por %p83, %p84
      %p86 = scmp.ne.s32.totalorder %s74, %s75
      %p87 = scmp.eq.s32.totalorder %s23, 1
      %p88 = por %p86, %p87
      %p90 = scmp.ne.s32.totalorder %s75, %s89
      %p91 = scmp.eq.s32.totalorder %s23, 0
      %p92 = por %p90, %p91
      %s94 = sadd.s32 %s93, 1
      %p97 = scmp.eq.s32.totalorder %s17, 1
      %p98 = scmp.ne.s32.totalorder %s93, %s95
      %p99 = scmp.eq.s32.totalorder %s17, 0
      %p100 = por %p98, %p99
      %p101 = scmp.ne.s32.totalorder %s93, %s95
      %p102 = scmp.eq.s32.totalorder %s22, 1
      %p103 = por %p101, %p102
      %p104 = scmp.ne.s32.totalorder %s95, %s96
      %p105 = scmp.eq.s32.totalorder %s22, 0
      %p106 = por %p104, %p105
      %p107 = scmp.ne.s32.totalorder %s95, %s96
      %p108 = scmp.eq.s32.totalorder %s23, 1
      %p109 = por %p107, %p108
      %p111 = scmp.ne.s32.totalorder %s96, %s110
      %p112 = scmp.eq.s32.totalorder %s23, 0
      %p113 = por %p111, %p112
      %s115 = sadd.s32 %s114, 1
      %p118 = scmp.eq.s32.totalorder %s17, 1
      %p119 = scmp.ne.s32.totalorder %s114, %s116
      %p120 = scmp.eq.s32.totalorder %s17, 0
      %p121 = por %p119, %p120
      %p122 = scmp.ne.s32.totalorder %s114, %s116
      %p123 = scmp.eq.s32.totalorder %s22, 1
      %p124 = por %p122, %p123
      %p125 = scmp.ne.s32.totalorder %s116, %s117
      %p126 = scmp.eq.s32.totalorder %s22, 0
      %p127 = por %p125, %p126
      %p128 = scmp.ne.s32.totalorder %s116, %s117
      %p129 = scmp.eq.s32.totalorder %s23, 1
      %p130 = por %p128, %p129
      %p132 = scmp.ne.s32.totalorder %s117, %s131
      %p133 = scmp.eq.s32.totalorder %s23, 0
      %p134 = por %p132, %p133
      %s135 = ssub.s32 %s17, %s24
      %p136 = scmp.eq.s32.totalorder %s135, 0
      %s138 = sadd.s32 %s137, 1
      %s139 = scalar_select %p136, %s137, %s138
      %p142 = pneg %p136
      %p143 = scmp.eq.s32.totalorder %s17, 1
      %p144 = por %p142, %p143
      %p145 = scmp.ne.s32.totalorder %s137, %s140
      %p146 = scmp.eq.s32.totalorder %s17, 0
      %p147 = por %p145, %p146
      %p148 = scmp.ne.s32.totalorder %s137, %s140
      %p149 = scmp.eq.s32.totalorder %s22, 1
      %p150 = por %p148, %p149
      %p151 = scmp.ne.s32.totalorder %s140, %s141
      %p152 = scmp.eq.s32.totalorder %s22, 0
      %p153 = por %p151, %p152
      %p154 = scmp.ne.s32.totalorder %s140, %s141
      %p155 = scmp.eq.s32.totalorder %s23, 1
      %p156 = por %p154, %p155
      %p158 = scmp.ne.s32.totalorder %s141, %s157
      %p159 = scmp.eq.s32.totalorder %s23, 0
      %p160 = por %p158, %p159
      %p161 = scmp.le.s32.totalorder 1, %s17
      %p162 = scmp.lt.s32.totalorder %s17, 3
      %p163 = pnand %p161, %p162
      %p164 = pneg %p163
      // Predicated region
      $region9: #{tpu_custom_call.1} parent=5 // pred_check
        _
      $region10: #{tpu_custom_call.1} parent=5 // pred_check_branch
        %166 = sbr.rel (%p163) target = $region12
      $region11: #{tpu_custom_call.1} parent=5 // pred_region
        %s167 = ssub.s32 %s17, 1
        // Predicated region
        $region13: #{tpu_custom_call.1} parent=11 // pred_check
          %p168 = pneg %p64
        $region14: #{tpu_custom_call.1} parent=11 // pred_check_branch
          %170 = sbr.rel (%p168) target = $region16
        $region15: #{tpu_custom_call.1} parent=11 // pred_region
          %s172 = ssub.s32 16, 16
          %173 = vsyncadd [#allocation5], %s172
          %s175 = sshll.u32 %s1, 4
          %s176 = int_to_ptr.vmem [resolvable:$true] %s175
          %178 = dma.vmem_to_smem %s176, 16, [#allocation6], [#allocation5]
        $region16: #{tpu_custom_call.1} parent=11 // pred_fallthru
          _
        // Predicated region
        $region17: #{tpu_custom_call.1} parent=11 // pred_check
          %p179 = pneg %p85
        $region18: #{tpu_custom_call.1} parent=11 // pred_check_branch
          %181 = sbr.rel (%p179) target = $region20
        $region19: #{tpu_custom_call.1} parent=11 // pred_region
          _
        $region20: #{tpu_custom_call.1} parent=11 // pred_fallthru
          _
        // Predicated region
        $region21: #{tpu_custom_call.1} parent=11 // pred_check
          %p182 = pneg %p106
        $region22: #{tpu_custom_call.1} parent=11 // pred_check_branch
          %184 = sbr.rel (%p182) target = $region24
        $region23: #{tpu_custom_call.1} parent=11 // pred_region
          %s186 = ssub.s32 16, 16
          %187 = vsyncadd [#allocation8], %s186
          %s189 = sshll.u32 %s3, 4
          %s190 = int_to_ptr.vmem [resolvable:$true] %s189
          %192 = dma.vmem_to_smem %s190, 16, [#allocation7], [#allocation8]
        $region24: #{tpu_custom_call.1} parent=11 // pred_fallthru
          _
        // Predicated region
        $region25: #{tpu_custom_call.1} parent=11 // pred_check
          %p193 = pneg %p127
        $region26: #{tpu_custom_call.1} parent=11 // pred_check_branch
          %195 = sbr.rel (%p193) target = $region28
        $region27: #{tpu_custom_call.1} parent=11 // pred_region
          %s197 = ssub.s32 16, 16
          %198 = vsyncadd [#allocation8], %s197
          %s200 = sshll.u32 %s4, 4
          %s201 = int_to_ptr.vmem [resolvable:$true] %s200
          %203 = dma.vmem_to_smem %s201, 16, [#allocation9], [#allocation8]
        $region28: #{tpu_custom_call.1} parent=11 // pred_fallthru
          _
      $region12: #{tpu_custom_call.1} parent=5 // pred_fallthru
        _
      %p204 = scmp.lt.s32.totalorder %s17, 2
      // Predicated region
      $region29: #{tpu_custom_call.1} parent=5 // pred_check
        %p205 = pneg %p204
      $region30: #{tpu_custom_call.1} parent=5 // pred_check_branch
        %207 = sbr.rel (%p205) target = $region32
      $region31: #{tpu_custom_call.1} parent=5 // pred_region
        // Predicated region
        $region33: #{tpu_custom_call.1} parent=31 // pred_check
          %p208 = pneg %p37
        $region34: #{tpu_custom_call.1} parent=31 // pred_check_branch
          %210 = sbr.rel (%p208) target = $region36
        $region35: #{tpu_custom_call.1} parent=31 // pred_region
          %s211 = sand.u32 %s27, 1
          %s212 = scalar_lea.sflag [#allocation4], %s211
          %s213 = sand.u32 %s27, 1
          %s214 = smul.addr %s213, 48
          %s215 = scalar_lea.vmem [#allocation3], %s214
          %s217 = ssub.s32 768, 768
          %218 = vsyncadd %s212, %s217
          %s219 = smul.addr %s17, 6
          %s220 = smul.addr %s219, 128
          %s221 = scalar_lea.hbm %s0, %s220
          %s222 = sshll.u32 %s215, 4
          %s223 = int_to_ptr.vmem [resolvable:$true] %s222
          %228 = dma.hbm_to_vmem [thread:$0]  %s221, 768, %s223, %s212, 128, 128, 8
        $region36: #{tpu_custom_call.1} parent=31 // pred_fallthru
          _
      $region32: #{tpu_custom_call.1} parent=5 // pred_fallthru
        _
      %p229 = scmp.le.s32.totalorder 1, %s17
      %p230 = scmp.lt.s32.totalorder %s17, 3
      %p231 = pnand %p229, %p230
      %p232 = pneg %p231
      // Predicated region
      $region37: #{tpu_custom_call.1} parent=5 // pred_check
        _
      $region38: #{tpu_custom_call.1} parent=5 // pred_check_branch
        %234 = sbr.rel (%p231) target = $region40
      $region39: #{tpu_custom_call.1} parent=5 // pred_region
        %s235 = ssub.s32 %s17, 1
        %s236 = sand.u32 %s30, 1
        %s237 = scalar_lea.sflag [#allocation4], %s236
        %s238 = sand.u32 %s30, 1
        %s239 = smul.addr %s238, 48
        %s240 = scalar_lea.vmem [#allocation3], %s239
        // Predicated region
        $region41: #{tpu_custom_call.1} parent=39 // pred_check
          %p241 = pneg %p43
        $region42: #{tpu_custom_call.1} parent=39 // pred_check_branch
          %243 = sbr.rel (%p241) target = $region44
        $region43: #{tpu_custom_call.1} parent=39 // pred_region
          %244 = dma.done %s237, 768
        $region44: #{tpu_custom_call.1} parent=39 // pred_fallthru
          _
        // Predicated region
        $region45: #{tpu_custom_call.1} parent=39 // pred_check
          %p245 = pneg %p64
        $region46: #{tpu_custom_call.1} parent=39 // pred_check_branch
          %247 = sbr.rel (%p245) target = $region48
        $region47: #{tpu_custom_call.1} parent=39 // pred_region
          %248 = dma.done [#allocation5], 16
        $region48: #{tpu_custom_call.1} parent=39 // pred_fallthru
          _
        // Predicated region
        $region49: #{tpu_custom_call.1} parent=39 // pred_check
          %p249 = pneg %p106
        $region50: #{tpu_custom_call.1} parent=39 // pred_check_branch
          %251 = sbr.rel (%p249) target = $region52
        $region51: #{tpu_custom_call.1} parent=39 // pred_region
          %252 = dma.done [#allocation8], 16
        $region52: #{tpu_custom_call.1} parent=39 // pred_fallthru
          _
        // Predicated region
        $region53: #{tpu_custom_call.1} parent=39 // pred_check
          %p253 = pneg %p127
        $region54: #{tpu_custom_call.1} parent=39 // pred_check_branch
          %255 = sbr.rel (%p253) target = $region56
        $region55: #{tpu_custom_call.1} parent=39 // pred_region
          %256 = dma.done [#allocation8], 16
        $region56: #{tpu_custom_call.1} parent=39 // pred_fallthru
          _
        %257 = sfence
        %s258 = sand.u32 %s30, 1
        %s259 = scalar_lea.sflag [#allocation4], %s258
        %s260 = sand.u32 %s30, 1
        %s261 = smul.addr %s260, 48
        %s262 = scalar_lea.vmem [#allocation3], %s261
        %p263 = pneg %p43
        %p264 = pneg %p40
        %p265 = pneg %p64
        %p266 = pneg %p61
        %p267 = pneg %p85
        %p268 = pneg %p82
        %p269 = pneg %p106
        %p270 = pneg %p103
        %p271 = pneg %p127
        %p272 = pneg %p124
        %p273 = pneg %p153
        %p274 = pneg %p150
        %p275 = scmp.lt.s32.totalorder %s22, 1
        %s276 = scalar_select %p275, %s22, 1
        %s277 = smul.addr %s276, 15
        %s278 = smul.addr %s277, 8
        %s279 = scalar_lea.vmem %s5, %s278
        %p280 = scmp.lt.s32.totalorder %s22, 1
        %s281 = scalar_select %p280, %s22, 1
        %s282 = smul.addr %s281, 15
        %s283 = smul.addr %s282, 8
        %s284 = scalar_lea.vmem %s5, %s283
        %v285 = vlaneseq
        %v286 = vshrl.u32 %v285, 7
        %v287 = vadd.s32 %v286, 8
        %v288 = vadd.s32 %v286, 16
        %v289 = vlaneseq
        %v290 = vand.u32 %v289, 127
        %vm291 = vcmp.ge.s32.totalorder %v286, 1
        %vm292 = vcmp.ge.s32.totalorder %v287, 1
        %vm293 = vcmp.ge.s32.totalorder %v288, 1
        %vm294 = vcmp.le.s32.totalorder %v286, 18
        %vm295 = vcmp.le.s32.totalorder %v287, 18
        %vm296 = vcmp.le.s32.totalorder %v288, 18
        %vm297 = vmand %vm291, %vm294
        %vm298 = vmand %vm292, %vm295
        %vm299 = vmand %vm293, %vm296
        %vm300 = vcmp.ge.s32.totalorder %v290, 1
        %vm301 = vmand %vm297, %vm300
        %vm302 = vmand %vm298, %vm300
        %vm303 = vmand %vm299, %vm300
        %vm304 = vcmp.le.s32.totalorder %v290, 18
        %vm305 = vmand %vm301, %vm304
        %vm306 = vmand %vm302, %vm304
        %vm307 = vmand %vm303, %vm304
        %s308 = sld [smem:[#allocation2]]
        %v309 = vstv %s308
        %s310 = sld [smem:[#allocation6]]
        %v311 = vld [vmem:[%s240] sm:$0xff]
        %v312 = vld [vmem:[%s240 + $0x8] sm:$0xff]
        %v313 = vstv %s310
        %v314 = vmul.f32 %v313, %v311
        %v315 = vmul.f32 %v313, %v312
        %s316 = sld [smem:[#allocation6 + $0x1]]
        %s317 = scalar_lea.vmem %s240, 16 [#allocation3]
        %v318 = vld [vmem:[%s317] sm:$0xff]
        %v319 = vld [vmem:[%s317 + $0x8] sm:$0xff]
        %v320 = vstv %s316
        %v321 = vmul.f32 %v320, %v318
        %v322 = vmul.f32 %v320, %v319
        %v323 = vadd.f32 %v314, %v321
        %v324 = vadd.f32 %v315, %v322
        %s325 = sld [smem:[#allocation6 + $0x2]]
        %s326 = scalar_lea.vmem %s240, 32 [#allocation3]
        %v327 = vld [vmem:[%s326] sm:$0xff]
        %v328 = vld [vmem:[%s326 + $0x8] sm:$0xff]
        %v329 = vstv %s325
        %v330 = vmul.f32 %v329, %v327
        %v331 = vmul.f32 %v329, %v328
        %v332 = vadd.f32 %v323, %v330
        %v333 = vadd.f32 %v324, %v331
        %v334 = vadd.f32 %v332, %v309
        %v335 = vadd.f32 %v333, %v309
        %vm336 = vcmask 130048
        %v337 = vsel %vm336, %v334, %v309
        %v338 = vsel %vm336, %v335, %v309
        %v339 = vrot.slane %v337, 6
        %v340 = vrot.slane %v338, 6
        %vm341 = vcmp.lt.s32.totalorder %v286, 2
        %v342 = vsel %vm341, %v340, %v309
        %v343 = vsel %vm341, %v339, %v340
        %v344 = vsel %vm341, %v309, %v339
        %345 = vrot.lane.b32.xlu0 %v344, 2
        %v346 = vpop.permute.xlu0 %345
        %347 = vrot.lane.b32.xlu0 %v343, 2
        %v348 = vpop.permute.xlu0 %347
        %349 = vrot.lane.b32.xlu0 %v342, 2
        %v350 = vpop.permute.xlu0 %349
        %v351 = vxor.u32 %v346, 2147483648
        %v352 = vxor.u32 %v348, 2147483648
        %v353 = vxor.u32 %v350, 2147483648
        %v354 = vmul.f32 %v351, 1.442695
        %v355 = vpow.pop %v354
        %v356 = vmul.f32 %v352, 1.442695
        %v357 = vpow.pop %v356
        %v358 = vmul.f32 %v353, 1.442695
        %v359 = vpow.pop %v358
        %v360 = vadd.f32 %v355, 1.0
        %v361 = vadd.f32 %v357, 1.0
        %v362 = vadd.f32 %v359, 1.0
        %v363 = vrcp.pop %v360
        %v364 = vmul.f32 1.0, %v363
        %v365 = vrcp.pop %v361
        %v366 = vmul.f32 1.0, %v365
        %v367 = vrcp.pop %v362
        %v368 = vmul.f32 1.0, %v367
        %v369 = vsel %vm305, %v364, 0.0
        %v370 = vsel %vm306, %v366, 0.0
        %v371 = vsel %vm307, %v368, 0.0
        %s372 = sld [smem:[#allocation7]]
        %v373 = vstv %s372
        %v374 = vmul.f32 %v373, %v369
        %v375 = vmul.f32 %v373, %v370
        %v376 = vmul.f32 %v373, %v371
        %s377 = sld [smem:[#allocation9]]
        %v378 = vstv %s377
        %v379 = vadd.f32 %v374, %v378
        %v380 = vadd.f32 %v375, %v378
        %v381 = vadd.f32 %v376, %v378
        %v382 = vxor.u32 %v379, 2147483648
        %v383 = vxor.u32 %v380, 2147483648
        %v384 = vxor.u32 %v381, 2147483648
        %v385 = vmul.f32 %v382, 1.442695
        %v386 = vpow.pop %v385
        %v387 = vmul.f32 %v383, 1.442695
        %v388 = vpow.pop %v387
        %v389 = vmul.f32 %v384, 1.442695
        %v390 = vpow.pop %v389
        %v391 = vadd.f32 %v386, 1.0
        %v392 = vadd.f32 %v388, 1.0
        %v393 = vadd.f32 %v390, 1.0
        %v394 = vrcp.pop %v391
        %v395 = vmul.f32 1.0, %v394
        %v396 = vrcp.pop %v392
        %v397 = vmul.f32 1.0, %v396
        %v398 = vrcp.pop %v393
        %v399 = vmul.f32 1.0, %v398
        %vm400 = vcmask 162816
        %401 = vst.msk [vmem:[%s284] sm:$0xff] %vm400, %v395
        %402 = vst.msk [vmem:[%s284 + $0x8] sm:$0xff] %vm400, %v397
        %vm403 = vcmask 158720
        %404 = vst.msk [vmem:[%s284 + $0x10] sm:$0xf] %vm403, %v399
        %s405 = sld [smem:[#allocation7 + $0x1]]
        %v406 = vstv %s405
        %v407 = vmul.f32 %v406, %v369
        %v408 = vmul.f32 %v406, %v370
        %v409 = vmul.f32 %v406, %v371
        %s410 = sld [smem:[#allocation9 + $0x1]]
        %v411 = vstv %s410
        %v412 = vadd.f32 %v407, %v411
        %v413 = vadd.f32 %v408, %v411
        %v414 = vadd.f32 %v409, %v411
        %v415 = vxor.u32 %v412, 2147483648
        %v416 = vxor.u32 %v413, 2147483648
        %v417 = vxor.u32 %v414, 2147483648
        %v418 = vmul.f32 %v415, 1.442695
        %v419 = vpow.pop %v418
        %v420 = vmul.f32 %v416, 1.442695
        %v421 = vpow.pop %v420
        %v422 = vmul.f32 %v417, 1.442695
        %v423 = vpow.pop %v422
        %v424 = vadd.f32 %v419, 1.0
        %v425 = vadd.f32 %v421, 1.0
        %v426 = vadd.f32 %v423, 1.0
        %v427 = vrcp.pop %v424
        %v428 = vmul.f32 1.0, %v427
        %v429 = vrcp.pop %v425
        %v430 = vmul.f32 1.0, %v429
        %v431 = vrcp.pop %v426
        %v432 = vmul.f32 1.0, %v431
        %s433 = scalar_lea.vmem %s284, 24
        %434 = vst.msk [vmem:[%s433] sm:$0xff] %vm400, %v428
        %435 = vst.msk [vmem:[%s433 + $0x8] sm:$0xff] %vm400, %v430
        %436 = vst.msk [vmem:[%s433 + $0x10] sm:$0xf] %vm403, %v432
        %s437 = sld [smem:[#allocation7 + $0x2]]
        %v438 = vstv %s437
        %v439 = vmul.f32 %v438, %v369
        %v440 = vmul.f32 %v438, %v370
        %v441 = vmul.f32 %v438, %v371
        %s442 = sld [smem:[#allocation9 + $0x2]]
        %v443 = vstv %s442
        %v444 = vadd.f32 %v439, %v443
        %v445 = vadd.f32 %v440, %v443
        %v446 = vadd.f32 %v441, %v443
        %v447 = vxor.u32 %v444, 2147483648
        %v448 = vxor.u32 %v445, 2147483648
        %v449 = vxor.u32 %v446, 2147483648
        %v450 = vmul.f32 %v447, 1.442695
        %v451 = vpow.pop %v450
        %v452 = vmul.f32 %v448, 1.442695
        %v453 = vpow.pop %v452
        %v454 = vmul.f32 %v449, 1.442695
        %v455 = vpow.pop %v454
        %v456 = vadd.f32 %v451, 1.0
        %v457 = vadd.f32 %v453, 1.0
        %v458 = vadd.f32 %v455, 1.0
        %v459 = vrcp.pop %v456
        %v460 = vmul.f32 1.0, %v459
        %v461 = vrcp.pop %v457
        %v462 = vmul.f32 1.0, %v461
        %v463 = vrcp.pop %v458
        %v464 = vmul.f32 1.0, %v463
        %s465 = scalar_lea.vmem %s284, 48
        %466 = vst.msk [vmem:[%s465] sm:$0xff] %vm400, %v460
        %467 = vst.msk [vmem:[%s465 + $0x8] sm:$0xff] %vm400, %v462
        %468 = vst.msk [vmem:[%s465 + $0x10] sm:$0xf] %vm403, %v464
        %s469 = sld [smem:[#allocation7 + $0x3]]
        %v470 = vstv %s469
        %v471 = vmul.f32 %v470, %v369
        %v472 = vmul.f32 %v470, %v370
        %v473 = vmul.f32 %v470, %v371
        %s474 = sld [smem:[#allocation9 + $0x3]]
        %v475 = vstv %s474
        %v476 = vadd.f32 %v471, %v475
        %v477 = vadd.f32 %v472, %v475
        %v478 = vadd.f32 %v473, %v475
        %v479 = vxor.u32 %v476, 2147483648
        %v480 = vxor.u32 %v477, 2147483648
        %v481 = vxor.u32 %v478, 2147483648
        %v482 = vmul.f32 %v479, 1.442695
        %v483 = vpow.pop %v482
        %v484 = vmul.f32 %v480, 1.442695
        %v485 = vpow.pop %v484
        %v486 = vmul.f32 %v481, 1.442695
        %v487 = vpow.pop %v486
        %v488 = vadd.f32 %v483, 1.0
        %v489 = vadd.f32 %v485, 1.0
        %v490 = vadd.f32 %v487, 1.0
        %v491 = vrcp.pop %v488
        %v492 = vmul.f32 1.0, %v491
        %v493 = vrcp.pop %v489
        %v494 = vmul.f32 1.0, %v493
        %v495 = vrcp.pop %v490
        %v496 = vmul.f32 1.0, %v495
        %s497 = scalar_lea.vmem %s284, 72
        %498 = vst.msk [vmem:[%s497] sm:$0xff] %vm400, %v492
        %499 = vst.msk [vmem:[%s497 + $0x8] sm:$0xff] %vm400, %v494
        %500 = vst.msk [vmem:[%s497 + $0x10] sm:$0xf] %vm403, %v496
        %s501 = sld [smem:[#allocation7 + $0x4]]
        %v502 = vstv %s501
        %v503 = vmul.f32 %v502, %v369
        %v504 = vmul.f32 %v502, %v370
        %v505 = vmul.f32 %v502, %v371
        %s506 = sld [smem:[#allocation9 + $0x4]]
        %v507 = vstv %s506
        %v508 = vadd.f32 %v503, %v507
        %v509 = vadd.f32 %v504, %v507
        %v510 = vadd.f32 %v505, %v507
        %v511 = vxor.u32 %v508, 2147483648
        %v512 = vxor.u32 %v509, 2147483648
        %v513 = vxor.u32 %v510, 2147483648
        %v514 = vmul.f32 %v511, 1.442695
        %v515 = vpow.pop %v514
        %v516 = vmul.f32 %v512, 1.442695
        %v517 = vpow.pop %v516
        %v518 = vmul.f32 %v513, 1.442695
        %v519 = vpow.pop %v518
        %v520 = vadd.f32 %v515, 1.0
        %v521 = vadd.f32 %v517, 1.0
        %v522 = vadd.f32 %v519, 1.0
        %v523 = vrcp.pop %v520
        %v524 = vmul.f32 1.0, %v523
        %v525 = vrcp.pop %v521
        %v526 = vmul.f32 1.0, %v525
        %v527 = vrcp.pop %v522
        %v528 = vmul.f32 1.0, %v527
        %s529 = scalar_lea.vmem %s284, 96
        %530 = vst.msk [vmem:[%s529] sm:$0xff] %vm400, %v524
        %531 = vst.msk [vmem:[%s529 + $0x8] sm:$0xff] %vm400, %v526
        %532 = vst.msk [vmem:[%s529 + $0x10] sm:$0xf] %vm403, %v528
        %p533 = scmp.lt.s32.totalorder %s22, 1
        %s534 = scalar_select %p533, %s22, 1
        %s535 = smul.addr %s534, 15
        %s536 = smul.addr %s535, 8
        %s537 = scalar_lea.vmem %s5, %s536
        // Predicated region
        $region57: #{tpu_custom_call.1} parent=39 // pred_check
          %p538 = pneg %p150
        $region58: #{tpu_custom_call.1} parent=39 // pred_check_branch
          %540 = sbr.rel (%p538) target = $region60
        $region59: #{tpu_custom_call.1} parent=39 // pred_region
          _
        $region60: #{tpu_custom_call.1} parent=39 // pred_fallthru
          _
      $region40: #{tpu_custom_call.1} parent=5 // pred_fallthru
        _
      %p541 = scmp.le.s32.totalorder 2, %s17
      // Predicated region
      $region61: #{tpu_custom_call.1} parent=5 // pred_check
        %p542 = pneg %p541
      $region62: #{tpu_custom_call.1} parent=5 // pred_check_branch
        %544 = sbr.rel (%p542) target = $region64
      $region63: #{tpu_custom_call.1} parent=5 // pred_region
        %s545 = ssub.s32 %s17, 2
        // Predicated region
        $region65: #{tpu_custom_call.1} parent=63 // pred_check
          %p546 = pneg %p156
        $region66: #{tpu_custom_call.1} parent=63 // pred_check_branch
          %548 = sbr.rel (%p546) target = $region68
        $region67: #{tpu_custom_call.1} parent=63 // pred_region
          %p549 = scmp.lt.s32.totalorder %s23, 1
          %s550 = scalar_select %p549, %s23, 1
          %s551 = smul.addr %s550, 15
          %s552 = smul.addr %s551, 8
          %s553 = scalar_lea.vmem %s5, %s552
        $region68: #{tpu_custom_call.1} parent=63 // pred_fallthru
          _
      $region64: #{tpu_custom_call.1} parent=5 // pred_fallthru
        _
    $region6: #{tpu_custom_call.1} parent=1 // loop_footer
      %s21 = sadd.s32 1, %s17
    $region7: #{tpu_custom_call.1} parent=1 // loop_footer_branch
      %16 = sbr.rel target = $region3
    $region8: #{tpu_custom_call.1} parent=1 // loop_exit
      _
    %554 = vsyncpa [#allocation4], 1
    %s555 = scalar_lea.sflag [#allocation4], 1
    %556 = vsyncpa %s555, 1
    %557 = vsyncpa [#allocation5], 1
    %s558 = scalar_lea.sflag [#allocation5], 1
    %559 = vsyncpa %s558, 1
    %560 = vsyncpa [#allocation8], 1

</llo_original>
